<compile_context>
chip_gen: v5e
topology: v5e:2x2
jax: 0.10.0
libtpu: 0.0.40
codegen_flags: <defaults>
</compile_context>

<pallas_src>
import jax
import jax.numpy as jnp
from jax.experimental import pallas as pl
from jax.experimental.pallas import tpu as pltpu

# Model dims (from the module)
HIDDEN_1 = 128
HIDDEN_2 = 16
HIDDEN_3 = 8
NUM_CLASSES = 4
PADDED_CLASSES = 128       # lane-dense output slab; real logits are [:, :4]
INPUT_SIZE = 32            # point_data_train.n_featurs -> synthetic small value
BN_EPS = 1e-5


def _round_up(x, m):
    return ((x + m - 1) // m) * m


def _mlp_kernel(x_ref,
                w1_ref, b1_ref,
                w2_ref, b2_ref,
                w3_ref, b3_ref,
                w4_ref, b4_ref,
                o_ref):
    """Fused 4-layer MLP. BN affines are pre-folded into w2/b2, w3/b3, w4/b4.

    bf16 operands feed the MXU; accumulation / bias / ReLU are f32.
    """
    h = jnp.dot(x_ref[...], w1_ref[...],
                preferred_element_type=jnp.float32) + b1_ref[...]
    h = jnp.maximum(h, 0.0).astype(jnp.bfloat16)

    h = jnp.dot(h, w2_ref[...],
                preferred_element_type=jnp.float32) + b2_ref[...]
    h = jnp.maximum(h, 0.0).astype(jnp.bfloat16)

    h = jnp.dot(h, w3_ref[...],
                preferred_element_type=jnp.float32) + b3_ref[...]
    h = jnp.maximum(h, 0.0).astype(jnp.bfloat16)

    out = jnp.dot(h, w4_ref[...],
                  preferred_element_type=jnp.float32) + b4_ref[...]
    o_ref[...] = out  # f32, lane-dense (tile_b, 128) store


def neural_net_forward(x, folded_params, *, tile_b=None):
    """Run the fused MLP kernel. `folded_params` come from prepare_params()."""
    B, F = x.shape
    assert F == INPUT_SIZE

    if tile_b is None:
        # Small batches: one grid step (no per-step overhead).
        # Large batches: 1024-row tiles (multiple of 256 for the v6e MXU),
        # multiple "parallel" steps so v7x can shard across its 2 TensorCores.
        tile_b = min(_round_up(B, 16), 1024)
    tile_b = _round_up(tile_b, 16)

    B_pad = _round_up(B, tile_b)
    if B_pad != B:
        x = jnp.pad(x, ((0, B_pad - B), (0, 0)))
    x = x.astype(jnp.bfloat16)

    (w1, b1, w2, b2, w3, b3, w4, b4) = folded_params

    def x_map(i):
        return (i, 0)

    def rep_map(i):
        return (0, 0)

    full = lambda a: pl.BlockSpec(a.shape, rep_map)

    grid = (B_pad // tile_b,)
    in_specs = [
        pl.BlockSpec((tile_b, F), x_map),
        full(w1), full(b1),
        full(w2), full(b2),
        full(w3), full(b3),
        full(w4), full(b4),
    ]
    out_spec = pl.BlockSpec((tile_b, PADDED_CLASSES), x_map)

    out = pl.pallas_call(
        _mlp_kernel,
        out_shape=jax.ShapeDtypeStruct((B_pad, PADDED_CLASSES), jnp.float32),
        grid_spec=pltpu.PrefetchScalarGridSpec(
            num_scalar_prefetch=0,
            grid=grid,
            in_specs=in_specs,
            out_specs=out_spec,
        ),
        compiler_params=pltpu.CompilerParams(
            dimension_semantics=("parallel",)),
    )(x, w1, b1, w2, b2, w3, b3, w4, b4)

    return out[:B, :NUM_CLASSES]


def init_params(key):
    """Deterministic synthetic parameters (shapes match the nn.Module), f32,
    BN already expressed as eval-mode per-feature affine (scale, shift)."""
    dims = [(INPUT_SIZE, HIDDEN_1), (HIDDEN_1, HIDDEN_2),
            (HIDDEN_2, HIDDEN_3), (HIDDEN_3, NUM_CLASSES)]
    keys = jax.random.split(key, 16)
    params = []
    ki = 0
    for li, (fan_in, fan_out) in enumerate(dims):
        # PyTorch Linear stores (out,in); we build the transposed (in,out) layout.
        bound = 1.0 / jnp.sqrt(fan_in)
        w = jax.random.uniform(keys[ki], (fan_in, fan_out), jnp.float32,
                               -bound, bound); ki += 1
        b = jax.random.uniform(keys[ki], (1, fan_out), jnp.float32,
                               -bound, bound); ki += 1
        params.extend([w, b])
        if li < 3:
            gamma = 1.0 + 0.1 * jax.random.normal(keys[ki], (1, fan_out)); ki += 1
            beta = 0.1 * jax.random.normal(keys[ki], (1, fan_out)); ki += 1
            running_mean = jnp.linspace(-0.5, 0.5, fan_out).reshape(1, fan_out)
            running_var = jnp.linspace(0.5, 1.5, fan_out).reshape(1, fan_out)
            scale = gamma / jnp.sqrt(running_var + BN_EPS)
            shift = beta - running_mean * scale
            params.extend([scale.astype(jnp.float32), shift.astype(jnp.float32)])
    return tuple(params)


def prepare_params(params):
    """Fold BN affines into the next layer, pad logits to 128 lanes, cast weights
    to bf16 (biases stay f32)."""
    (w1, b1, s1, t1, w2, b2, s2, t2, w3, b3, s3, t3, w4, b4) = params

    # Exact fold: (relu(.)*s + t) @ W + b == relu(.) @ (diag(s) W) + (t @ W + b)
    w2f = s1.reshape(-1, 1) * w2
    b2f = b2 + t1 @ w2
    w3f = s2.reshape(-1, 1) * w3
    b3f = b3 + t2 @ w3
    w4f = s3.reshape(-1, 1) * w4
    b4f = b4 + t3 @ w4

    # Lane-dense output: pad class dim 4 -> 128 with zeros.
    pad_c = PADDED_CLASSES - NUM_CLASSES
    w4p = jnp.pad(w4f, ((0, 0), (0, pad_c)))
    b4p = jnp.pad(b4f, ((0, 0), (0, pad_c)))

    bf = jnp.bfloat16
    f32 = jnp.float32
    return (w1.astype(bf), b1.astype(f32),
            w2f.astype(bf), b2f.astype(f32),
            w3f.astype(bf), b3f.astype(f32),
            w4p.astype(bf), b4p.astype(f32))


def reference_forward_folded(x_bf16, folded):
    """Pure-JAX reference replicating the kernel's exact precision path."""
    (w1, b1, w2, b2, w3, b3, w4, b4) = folded
    f32, bf = jnp.float32, jnp.bfloat16
    h = jnp.maximum(jnp.dot(x_bf16.astype(f32), w1.astype(f32)) + b1, 0.0).astype(bf)
    h = jnp.maximum(jnp.dot(h.astype(f32), w2.astype(f32)) + b2, 0.0).astype(bf)
    h = jnp.maximum(jnp.dot(h.astype(f32), w3.astype(f32)) + b3, 0.0).astype(bf)
    out = jnp.dot(h.astype(f32), w4.astype(f32)) + b4
    return out[:, :NUM_CLASSES]


def reference_forward_original(x, params):
    """Pure-f32 reference of the original (unfolded) module math."""
    (w1, b1, s1, t1, w2, b2, s2, t2, w3, b3, s3, t3, w4, b4) = params
    h = jnp.maximum(x @ w1 + b1, 0.0) * s1 + t1
    h = jnp.maximum(h @ w2 + b2, 0.0) * s2 + t2
    h = jnp.maximum(h @ w3 + b3, 0.0) * s3 + t3
    return h @ w4 + b4


if __name__ == "__main__":
    key = jax.random.PRNGKey(0)
    pkey, xkey = jax.random.split(key)

    raw_params = init_params(pkey)
    folded_params = prepare_params(raw_params)

    batch = 16
    x = jax.random.normal(xkey, (batch, INPUT_SIZE), jnp.float32)

    out = neural_net_forward(x, folded_params)
    out = jax.block_until_ready(out)
    assert out.shape == (batch, NUM_CLASSES)

    # Strict check: kernel vs a pure-JAX path at identical (bf16-in / f32-acc) precision.
    ref_strict = reference_forward_folded(x.astype(jnp.bfloat16), folded_params)
    assert jnp.allclose(out, ref_strict, atol=1e-3, rtol=1e-3), (
        f"strict max abs err {jnp.max(jnp.abs(out - ref_strict))}")

    # Semantic check: vs the original unfolded f32 module math (loose tol for bf16 cast).
    ref_f32 = reference_forward_original(x, raw_params)
    assert jnp.allclose(out, ref_f32, atol=1e-1, rtol=1e-1), (
        f"semantic max abs err {jnp.max(jnp.abs(out - ref_f32))}")

    print("KERNEL_OK")
</pallas_src>

<mosaic_0001>
module attributes {stable_mosaic.version = 11 : i64} {
  func.func @_mlp_kernel(%arg0: i32, %arg1: memref<16x32xbf16, #tpu.memory_space<vmem>>, %arg2: memref<32x128xbf16, #tpu.memory_space<vmem>>, %arg3: memref<1x128xf32, #tpu.memory_space<vmem>>, %arg4: memref<128x16xbf16, #tpu.memory_space<vmem>>, %arg5: memref<1x16xf32, #tpu.memory_space<vmem>>, %arg6: memref<16x8xbf16, #tpu.memory_space<vmem>>, %arg7: memref<1x8xf32, #tpu.memory_space<vmem>>, %arg8: memref<8x128xbf16, #tpu.memory_space<vmem>>, %arg9: memref<1x128xf32, #tpu.memory_space<vmem>>, %arg10: memref<16x128xf32, #tpu.memory_space<vmem>>) attributes {dimension_semantics = [#tpu.dimension_semantics<parallel>], iteration_bounds = array<i64: 1>, scalar_prefetch = 0 : i64, scratch_operands = 0 : i64, tpu.core_type = #tpu.core_type<tc>, window_params = [{transform_indices = @transform_0, window_bounds = array<i64: 16, 32>}, {pipeline_mode = #tpu.pipeline_mode<synchronous>, transform_indices = @transform_1, window_bounds = array<i64: 32, 128>}, {pipeline_mode = #tpu.pipeline_mode<synchronous>, transform_indices = @transform_2, window_bounds = array<i64: 1, 128>}, {pipeline_mode = #tpu.pipeline_mode<synchronous>, transform_indices = @transform_3, window_bounds = array<i64: 128, 16>}, {pipeline_mode = #tpu.pipeline_mode<synchronous>, transform_indices = @transform_4, window_bounds = array<i64: 1, 16>}, {pipeline_mode = #tpu.pipeline_mode<synchronous>, transform_indices = @transform_5, window_bounds = array<i64: 16, 8>}, {pipeline_mode = #tpu.pipeline_mode<synchronous>, transform_indices = @transform_6, window_bounds = array<i64: 1, 8>}, {pipeline_mode = #tpu.pipeline_mode<synchronous>, transform_indices = @transform_7, window_bounds = array<i64: 8, 128>}, {pipeline_mode = #tpu.pipeline_mode<synchronous>, transform_indices = @transform_8, window_bounds = array<i64: 1, 128>}, {transform_indices = @transform_9, window_bounds = array<i64: 16, 128>}]} {
    %c0 = arith.constant 0 : index
    %c0_0 = arith.constant 0 : index
    %0 = vector.load %arg1[%c0, %c0_0] : memref<16x32xbf16, #tpu.memory_space<vmem>>, vector<16x32xbf16>
    %c0_1 = arith.constant 0 : index
    %c0_2 = arith.constant 0 : index
    %1 = vector.load %arg2[%c0_1, %c0_2] : memref<32x128xbf16, #tpu.memory_space<vmem>>, vector<32x128xbf16>
    %cst = arith.constant dense<0.000000e+00> : vector<16x128xf32>
    %2 = tpu.matmul %0, %1, %cst {dimension_numbers = #tpu.dot_dimension_numbers<[1], [0], [0], [1], [0, 0, 1, 1], [], []>} : vector<16x32xbf16>, vector<32x128xbf16>, vector<16x128xf32> -> vector<16x128xf32>
    %c0_3 = arith.constant 0 : index
    %c0_4 = arith.constant 0 : index
    %3 = vector.load %arg3[%c0_3, %c0_4] : memref<1x128xf32, #tpu.memory_space<vmem>>, vector<1x128xf32>
    %4 = vector.broadcast %3 : vector<1x128xf32> to vector<16x128xf32>
    %5 = arith.addf %2, %4 : vector<16x128xf32>
    %cst_5 = arith.constant 0.000000e+00 : f32
    %6 = vector.broadcast %cst_5 : f32 to vector<16x128xf32>
    %7 = arith.maximumf %5, %6 : vector<16x128xf32>
    %8 = arith.truncf %7 : vector<16x128xf32> to vector<16x128xbf16>
    %c0_6 = arith.constant 0 : index
    %c0_7 = arith.constant 0 : index
    %9 = vector.load %arg4[%c0_6, %c0_7] : memref<128x16xbf16, #tpu.memory_space<vmem>>, vector<128x16xbf16>
    %cst_8 = arith.constant dense<0.000000e+00> : vector<16x16xf32>
    %10 = tpu.matmul %8, %9, %cst_8 {dimension_numbers = #tpu.dot_dimension_numbers<[1], [0], [0], [1], [0, 0, 1, 1], [], []>} : vector<16x128xbf16>, vector<128x16xbf16>, vector<16x16xf32> -> vector<16x16xf32>
    %c0_9 = arith.constant 0 : index
    %c0_10 = arith.constant 0 : index
    %11 = vector.load %arg5[%c0_9, %c0_10] : memref<1x16xf32, #tpu.memory_space<vmem>>, vector<1x16xf32>
    %12 = vector.broadcast %11 : vector<1x16xf32> to vector<16x16xf32>
    %13 = arith.addf %10, %12 : vector<16x16xf32>
    %cst_11 = arith.constant 0.000000e+00 : f32
    %14 = vector.broadcast %cst_11 : f32 to vector<16x16xf32>
    %15 = arith.maximumf %13, %14 : vector<16x16xf32>
    %16 = arith.truncf %15 : vector<16x16xf32> to vector<16x16xbf16>
    %c0_12 = arith.constant 0 : index
    %c0_13 = arith.constant 0 : index
    %17 = vector.load %arg6[%c0_12, %c0_13] : memref<16x8xbf16, #tpu.memory_space<vmem>>, vector<16x8xbf16>
    %cst_14 = arith.constant dense<0.000000e+00> : vector<16x8xf32>
    %18 = tpu.matmul %16, %17, %cst_14 {dimension_numbers = #tpu.dot_dimension_numbers<[1], [0], [0], [1], [0, 0, 1, 1], [], []>} : vector<16x16xbf16>, vector<16x8xbf16>, vector<16x8xf32> -> vector<16x8xf32>
    %c0_15 = arith.constant 0 : index
    %c0_16 = arith.constant 0 : index
    %19 = vector.load %arg7[%c0_15, %c0_16] : memref<1x8xf32, #tpu.memory_space<vmem>>, vector<1x8xf32>
    %20 = vector.broadcast %19 : vector<1x8xf32> to vector<16x8xf32>
    %21 = arith.addf %18, %20 : vector<16x8xf32>
    %cst_17 = arith.constant 0.000000e+00 : f32
    %22 = vector.broadcast %cst_17 : f32 to vector<16x8xf32>
    %23 = arith.maximumf %21, %22 : vector<16x8xf32>
    %24 = arith.truncf %23 : vector<16x8xf32> to vector<16x8xbf16>
    %c0_18 = arith.constant 0 : index
    %c0_19 = arith.constant 0 : index
    %25 = vector.load %arg8[%c0_18, %c0_19] : memref<8x128xbf16, #tpu.memory_space<vmem>>, vector<8x128xbf16>
    %cst_20 = arith.constant dense<0.000000e+00> : vector<16x128xf32>
    %26 = tpu.matmul %24, %25, %cst_20 {dimension_numbers = #tpu.dot_dimension_numbers<[1], [0], [0], [1], [0, 0, 1, 1], [], []>} : vector<16x8xbf16>, vector<8x128xbf16>, vector<16x128xf32> -> vector<16x128xf32>
    %c0_21 = arith.constant 0 : index
    %c0_22 = arith.constant 0 : index
    %27 = vector.load %arg9[%c0_21, %c0_22] : memref<1x128xf32, #tpu.memory_space<vmem>>, vector<1x128xf32>
    %28 = vector.broadcast %27 : vector<1x128xf32> to vector<16x128xf32>
    %29 = arith.addf %26, %28 : vector<16x128xf32>
    %c0_23 = arith.constant 0 : index
    %c0_24 = arith.constant 0 : index
    %30 = vector.load %arg10[%c0_23, %c0_24] : memref<16x128xf32, #tpu.memory_space<vmem>>, vector<16x128xf32>
    tpu.vector_store %arg10[%c0_23, %c0_24], %29 {strides = array<i32>} : memref<16x128xf32, #tpu.memory_space<vmem>>, vector<16x128xf32>,
    return
  }
  func.func @transform_0(%arg0: i32) -> (i32, i32) {
    %c0_i32 = arith.constant 0 : i32
    %c0_i32_0 = arith.constant 0 : i32
    return %arg0, %c0_i32 : i32, i32
  }
  func.func @transform_1(%arg0: i32) -> (i32, i32) {
    %c0_i32 = arith.constant 0 : i32
    %c0_i32_0 = arith.constant 0 : i32
    %c0_i32_1 = arith.constant 0 : i32
    return %c0_i32, %c0_i32_0 : i32, i32
  }
  func.func @transform_2(%arg0: i32) -> (i32, i32) {
    %c0_i32 = arith.constant 0 : i32
    %c0_i32_0 = arith.constant 0 : i32
    %c0_i32_1 = arith.constant 0 : i32
    return %c0_i32, %c0_i32_0 : i32, i32
  }
  func.func @transform_3(%arg0: i32) -> (i32, i32) {
    %c0_i32 = arith.constant 0 : i32
    %c0_i32_0 = arith.constant 0 : i32
    %c0_i32_1 = arith.constant 0 : i32
    return %c0_i32, %c0_i32_0 : i32, i32
  }
  func.func @transform_4(%arg0: i32) -> (i32, i32) {
    %c0_i32 = arith.constant 0 : i32
    %c0_i32_0 = arith.constant 0 : i32
    %c0_i32_1 = arith.constant 0 : i32
    return %c0_i32, %c0_i32_0 : i32, i32
  }
  func.func @transform_5(%arg0: i32) -> (i32, i32) {
    %c0_i32 = arith.constant 0 : i32
    %c0_i32_0 = arith.constant 0 : i32
    %c0_i32_1 = arith.constant 0 : i32
    return %c0_i32, %c0_i32_0 : i32, i32
  }
  func.func @transform_6(%arg0: i32) -> (i32, i32) {
    %c0_i32 = arith.constant 0 : i32
    %c0_i32_0 = arith.constant 0 : i32
    %c0_i32_1 = arith.constant 0 : i32
    return %c0_i32, %c0_i32_0 : i32, i32
  }
  func.func @transform_7(%arg0: i32) -> (i32, i32) {
    %c0_i32 = arith.constant 0 : i32
    %c0_i32_0 = arith.constant 0 : i32
    %c0_i32_1 = arith.constant 0 : i32
    return %c0_i32, %c0_i32_0 : i32, i32
  }
  func.func @transform_8(%arg0: i32) -> (i32, i32) {
    %c0_i32 = arith.constant 0 : i32
    %c0_i32_0 = arith.constant 0 : i32
    %c0_i32_1 = arith.constant 0 : i32
    return %c0_i32, %c0_i32_0 : i32, i32
  }
  func.func @transform_9(%arg0: i32) -> (i32, i32) {
    %c0_i32 = arith.constant 0 : i32
    %c0_i32_0 = arith.constant 0 : i32
    return %arg0, %c0_i32 : i32, i32
  }
}

</mosaic_0001>

<llo_original>
// kernel: tpu_custom_call.1
$region0: #{tpu_custom_call.1}
  #allocation0 [shape = 'u32[]', space=smem, size = 0x4, offset = 0x4, fixed_abs, tag = 'smem constant byte address 0x4 - core index']
  #allocation1 [shape = 'u32[72,128]{1,0:T(1,128)}', space=vmem, size = 0x9000, scoped, tag = 'internal scratch']
  %s0 = inlined_call_operand.vmem [shape: bf16[16,32], index: 0, kind: input, shape index: {}]
  %s1 = inlined_call_operand.vmem [shape: bf16[32,128], index: 1, kind: input, shape index: {}]
  %s2 = inlined_call_operand.vmem [shape: f32[1,128], index: 2, kind: input, shape index: {}]
  %s3 = inlined_call_operand.vmem [shape: bf16[128,16], index: 3, kind: input, shape index: {}]
  %s4 = inlined_call_operand.vmem [shape: f32[1,16], index: 4, kind: input, shape index: {}]
  %s5 = inlined_call_operand.vmem [shape: bf16[16,8], index: 5, kind: input, shape index: {}]
  %s6 = inlined_call_operand.vmem [shape: f32[1,8], index: 6, kind: input, shape index: {}]
  %s7 = inlined_call_operand.vmem [shape: bf16[8,128], index: 7, kind: input, shape index: {}]
  %s8 = inlined_call_operand.vmem [shape: f32[1,128], index: 8, kind: input, shape index: {}]
  %s9 = inlined_call_operand.hbm [shape: f32[16,128], index: 9, kind: output, shape index: {}]
  %s10 = sld [smem:[#allocation0]]
  $region46: #{tpu_custom_call.1} parent=0
    _
  %s12 = ssub.s32 1, %s10
  %s13 = scalar_select 0, %s12, %s10
  $region1: #{tpu_custom_call.1} parent=0
    #allocation2 [shape = 'u8[8192]{0}', space=vmem, size = 0x2000, scoped, tag = 'output window, operand 0, single buffered']
    #allocation3 [shape = 's32[1]{0}', space=sflag, size = 0x4, scoped, tag = 'scoped memory for tpu_custom_call.1']
    %14 = vsyncpa [#allocation3], 0
    // Predicated region
    $region2: #{tpu_custom_call.1} parent=1 // pred_check
      _
    $region3: #{tpu_custom_call.1} parent=1 // pred_check_branch
      %16 = sbr.rel (0) target = $region5
    $region4: #{tpu_custom_call.1} parent=1 // pred_region
      _
    $region5: #{tpu_custom_call.1} parent=1 // pred_fallthru
      _
    // Predicated region
    $region6: #{tpu_custom_call.1} parent=1 // pred_check
      _
    $region7: #{tpu_custom_call.1} parent=1 // pred_check_branch
      %18 = sbr.rel (0) target = $region9
    $region8: #{tpu_custom_call.1} parent=1 // pred_region
      _
    $region9: #{tpu_custom_call.1} parent=1 // pred_fallthru
      _
    // Predicated region
    $region10: #{tpu_custom_call.1} parent=1 // pred_check
      _
    $region11: #{tpu_custom_call.1} parent=1 // pred_check_branch
      %20 = sbr.rel (0) target = $region13
    $region12: #{tpu_custom_call.1} parent=1 // pred_region
      _
    $region13: #{tpu_custom_call.1} parent=1 // pred_fallthru
      _
    // Predicated region
    $region14: #{tpu_custom_call.1} parent=1 // pred_check
      _
    $region15: #{tpu_custom_call.1} parent=1 // pred_check_branch
      %22 = sbr.rel (0) target = $region17
    $region16: #{tpu_custom_call.1} parent=1 // pred_region
      _
    $region17: #{tpu_custom_call.1} parent=1 // pred_fallthru
      _
    // Predicated region
    $region18: #{tpu_custom_call.1} parent=1 // pred_check
      _
    $region19: #{tpu_custom_call.1} parent=1 // pred_check_branch
      %24 = sbr.rel (0) target = $region21
    $region20: #{tpu_custom_call.1} parent=1 // pred_region
      _
    $region21: #{tpu_custom_call.1} parent=1 // pred_fallthru
      _
    // Predicated region
    $region22: #{tpu_custom_call.1} parent=1 // pred_check
      _
    $region23: #{tpu_custom_call.1} parent=1 // pred_check_branch
      %26 = sbr.rel (0) target = $region25
    $region24: #{tpu_custom_call.1} parent=1 // pred_region
      _
    $region25: #{tpu_custom_call.1} parent=1 // pred_fallthru
      _
    // Predicated region
    $region26: #{tpu_custom_call.1} parent=1 // pred_check
      _
    $region27: #{tpu_custom_call.1} parent=1 // pred_check_branch
      %28 = sbr.rel (0) target = $region29
    $region28: #{tpu_custom_call.1} parent=1 // pred_region
      _
    $region29: #{tpu_custom_call.1} parent=1 // pred_fallthru
      _
    // Predicated region
    $region30: #{tpu_custom_call.1} parent=1 // pred_check
      _
    $region31: #{tpu_custom_call.1} parent=1 // pred_check_branch
      %30 = sbr.rel (0) target = $region33
    $region32: #{tpu_custom_call.1} parent=1 // pred_region
      _
    $region33: #{tpu_custom_call.1} parent=1 // pred_fallthru
      _
    // Predicated region
    $region34: #{tpu_custom_call.1} parent=1 // pred_check
      _
    $region35: #{tpu_custom_call.1} parent=1 // pred_check_branch
      %32 = sbr.rel (0) target = $region37
    $region36: #{tpu_custom_call.1} parent=1 // pred_region
      _
    $region37: #{tpu_custom_call.1} parent=1 // pred_fallthru
      _
    %v34 = vld [vmem:[%s0] sm:$0xf]
    %v35 = vld [vmem:[%s0 + $0x4] sm:$0xf]
    %v36 = vld [vmem:[%s1] sm:$0xf]
    %v37 = vld [vmem:[%s1 + $0x4] sm:$0xf]
    %v38 = vld [vmem:[%s1 + $0x8] sm:$0xf]
    %v39 = vld [vmem:[%s1 + $0xc] sm:$0xf]
    %v40 = vld [vmem:[%s2] sm:$0x1]
    %v42 = vperm.slane %v40, 0
    %v46 = vunpack.c.l.b16 %v34
    %v47 = vunpack.c.l.b16 %v35
    %v48 = vpack.c.b16 %v47, %v46
    %v53 = vunpack.c.l.b16 %v36
    %v54 = vunpack.c.l.b16 %v37
    %v55 = vunpack.c.l.b16 %v38
    %v56 = vunpack.c.l.b16 %v39
    %v57 = vpack.c.b16 %v54, %v53
    %v58 = vpack.c.b16 %v56, %v55
    %vm61 = vcmask 261120
    %v63 = vsel %vm61, %v48, 0
    %65 = vmatpush.bf16.msra.mxu0 0
    %66 = vmatpush.bf16.msra.mxu0 0
    %67 = vmatpush.bf16.msra.mxu0 0
    %68 = vmatpush.bf16.msra.mxu0 0
    %69 = vmatpush.bf16.msra.mxu0 0
    %70 = vmatpush.bf16.msra.mxu0 0
    %71 = vmatpush.bf16.msra.mxu0 %v58
    %72 = vmatpush.bf16.msra.mxu0 %v57
    %73 = vmatmul.bf16.gmra.mxu0 %v63
    %v74 = vpop.f32.mrf.mxu0
    %v75 = vadd.f32 %v42, %v74
    %v76 = vpop.f32.mrf.mxu0
    %v77 = vadd.f32 %v42, %v76
    %78 = vdwg.mxu0
    %v79 = vmax.f32 %v75, 0.0
    %v80 = vmax.f32 %v77, 0.0
    %v81 = vpack.c.bf16 %v80, %v79
    %v82 = vld [vmem:[%s3] sm:$0xf]
    %v83 = vld [vmem:[%s3 + $0x4] sm:$0xf]
    %v84 = vld [vmem:[%s3 + $0x8] sm:$0xf]
    %v85 = vld [vmem:[%s3 + $0xc] sm:$0xf]
    %v86 = vld [vmem:[%s3 + $0x10] sm:$0xf]
    %v87 = vld [vmem:[%s3 + $0x14] sm:$0xf]
    %v88 = vld [vmem:[%s3 + $0x18] sm:$0xf]
    %v89 = vld [vmem:[%s3 + $0x1c] sm:$0xf]
    %v90 = vld [vmem:[%s3 + $0x20] sm:$0xf]
    %v91 = vld [vmem:[%s3 + $0x24] sm:$0xf]
    %v92 = vld [vmem:[%s3 + $0x28] sm:$0xf]
    %v93 = vld [vmem:[%s3 + $0x2c] sm:$0xf]
    %v94 = vld [vmem:[%s3 + $0x30] sm:$0xf]
    %v95 = vld [vmem:[%s3 + $0x34] sm:$0xf]
    %v96 = vld [vmem:[%s3 + $0x38] sm:$0xf]
    %v97 = vld [vmem:[%s3 + $0x3c] sm:$0xf]
    %v98 = vld [vmem:[%s4] sm:$0x1]
    %v100 = vperm.slane %v98, 0
    %v118 = vunpack.c.l.b16 %v82
    %v119 = vunpack.c.l.b16 %v83
    %v120 = vunpack.c.l.b16 %v84
    %v121 = vunpack.c.l.b16 %v85
    %v122 = vunpack.c.l.b16 %v86
    %v123 = vunpack.c.l.b16 %v87
    %v124 = vunpack.c.l.b16 %v88
    %v125 = vunpack.c.l.b16 %v89
    %v126 = vunpack.c.l.b16 %v90
    %v127 = vunpack.c.l.b16 %v91
    %v128 = vunpack.c.l.b16 %v92
    %v129 = vunpack.c.l.b16 %v93
    %v130 = vunpack.c.l.b16 %v94
    %v131 = vunpack.c.l.b16 %v95
    %v132 = vunpack.c.l.b16 %v96
    %v133 = vunpack.c.l.b16 %v97
    %v134 = vpack.c.b16 %v119, %v118
    %v135 = vpack.c.b16 %v121, %v120
    %v136 = vpack.c.b16 %v123, %v122
    %v137 = vpack.c.b16 %v125, %v124
    %v138 = vpack.c.b16 %v127, %v126
    %v139 = vpack.c.b16 %v129, %v128
    %v140 = vpack.c.b16 %v131, %v130
    %v141 = vpack.c.b16 %v133, %v132
    %150 = vmatpush.bf16.msra.mxu0 %v141
    %151 = vmatpush.bf16.msra.mxu0 %v140
    %152 = vmatpush.bf16.msra.mxu0 %v139
    %153 = vmatpush.bf16.msra.mxu0 %v138
    %154 = vmatpush.bf16.msra.mxu0 %v137
    %155 = vmatpush.bf16.msra.mxu0 %v136
    %156 = vmatpush.bf16.msra.mxu0 %v135
    %157 = vmatpush.bf16.msra.mxu0 %v134
    %158 = vmatmul.bf16.gmra.mxu0 %v81
    %v159 = vpop.f32.mrf.mxu0
    %v160 = vadd.f32 %v100, %v159
    %v161 = vpop.f32.mrf.mxu0
    %v162 = vadd.f32 %v100, %v161
    %163 = vdwg.mxu0
    %v164 = vmax.f32 %v160, 0.0
    %v165 = vmax.f32 %v162, 0.0
    %v166 = vpack.c.bf16 %v165, %v164
    %v167 = vld [vmem:[%s5] sm:$0xf]
    %v168 = vld [vmem:[%s5 + $0x4] sm:$0xf]
    %v169 = vld [vmem:[%s6] sm:$0x1]
    %v171 = vperm.slane %v169, 0
    %v175 = vunpack.c.l.b16 %v167
    %v176 = vunpack.c.l.b16 %v168
    %v177 = vpack.c.b16 %v176, %v175
    %vm179 = vcmask 130048
    %v181 = vsel %vm179, %v166, 0
    %183 = vmatpush.bf16.msra.mxu0 0
    %184 = vmatpush.bf16.msra.mxu0 0
    %185 = vmatpush.bf16.msra.mxu0 0
    %186 = vmatpush.bf16.msra.mxu0 0
    %187 = vmatpush.bf16.msra.mxu0 0
    %188 = vmatpush.bf16.msra.mxu0 0
    %189 = vmatpush.bf16.msra.mxu0 0
    %190 = vmatpush.bf16.msra.mxu0 %v177
    %191 = vmatmul.bf16.gmra.mxu0 %v181
    %v192 = vpop.f32.mrf.mxu0
    %v193 = vadd.f32 %v171, %v192
    %v194 = vpop.f32.mrf.mxu0
    %v195 = vadd.f32 %v171, %v194
    %196 = vdwg.mxu0
    %v197 = vmax.f32 %v193, 0.0
    %v198 = vmax.f32 %v195, 0.0
    %v199 = vpack.c.bf16 %v198, %v197
    %v200 = vld [vmem:[%s7] sm:$0xf]
    %v201 = vld [vmem:[%s8] sm:$0x1]
    %v203 = vperm.slane %v201, 0
    %vm205 = vcmask 64512
    %v207 = vsel %vm205, %v199, 0
    %vm209 = vcmask 1043456
    %v211 = vsel %vm209, %v200, 0
    %213 = vmatpush.bf16.msra.mxu0 0
    %214 = vmatpush.bf16.msra.mxu0 0
    %215 = vmatpush.bf16.msra.mxu0 0
    %216 = vmatpush.bf16.msra.mxu0 0
    %217 = vmatpush.bf16.msra.mxu0 0
    %218 = vmatpush.bf16.msra.mxu0 0
    %219 = vmatpush.bf16.msra.mxu0 0
    %220 = vmatpush.bf16.msra.mxu0 %v211
    %221 = vmatmul.bf16.gmra.mxu0 %v207
    %v222 = vpop.f32.mrf.mxu0
    %v223 = vadd.f32 %v203, %v222
    %v224 = vpop.f32.mrf.mxu0
    %v225 = vadd.f32 %v203, %v224
    %226 = vdwg.mxu0
    %227 = vst [vmem:[#allocation2] sm:$0xff] %v223
    %228 = vst [vmem:[#allocation2 + $0x8] sm:$0xff] %v225
    // Predicated region
    $region38: #{tpu_custom_call.1} parent=1 // pred_check
      _
    $region39: #{tpu_custom_call.1} parent=1 // pred_check_branch
      %230 = sbr.rel (0) target = $region41
    $region40: #{tpu_custom_call.1} parent=1 // pred_region
      %232 = vsyncadd [#allocation3], 0
      %s233 = sshll.u32 [#allocation2], 4
      %s234 = int_to_ptr.vmem [resolvable:$true] %s233
      %s235 = sshll.u32 %s9, 4
      %s236 = int_to_ptr.hbm [resolvable:$true] %s235
      %241 = dma.vmem_to_hbm [thread:$0]  %s234, 256, %s236, [#allocation3], 128, 128, 8
    $region41: #{tpu_custom_call.1} parent=1 // pred_fallthru
      _
    // Predicated region
    $region42: #{tpu_custom_call.1} parent=1 // pred_check
      _
    $region43: #{tpu_custom_call.1} parent=1 // pred_check_branch
      %243 = sbr.rel (0) target = $region45
    $region44: #{tpu_custom_call.1} parent=1 // pred_region
      %245 = dma.done [#allocation3], 256
    $region45: #{tpu_custom_call.1} parent=1 // pred_fallthru
      _
    %246 = vsyncpa [#allocation3], 1

</llo_original>
